<compile_context>
chip_gen: v6e
topology: v6e:2x2x1
jax: 0.10.0
libtpu: 0.0.40
codegen_flags: <defaults>
</compile_context>

<pallas_src>
import functools

import jax
import jax.numpy as jnp
from jax.experimental import pallas as pl
from jax.experimental.pallas import tpu as pltpu


def _round_up(x, m):
    return ((x + m - 1) // m) * m


# -----------------------------------------------------------------------------
# Per-generation tiling policy.
# -----------------------------------------------------------------------------
def _generation_caps():
    """Returns (cap_bm, cap_bn, cap_bk, vmem_limit_cap, small_vmem).

    v5e/v6e have 128 MiB VMEM -> large tiles to cut re-streaming of X across the
    N grid and W across the M grid.  v7x has 64 MiB VMEM (but 3.2 TB/s HBM) ->
    keep moderate tiles and a <=44 MiB scoped limit; it also has 2 TensorCores
    (handled by the bn-split below).
    """
    try:
        vmem_bytes = int(pltpu.get_tpu_info().vmem_capacity_bytes)
    except Exception:  # conservative fallback (v7x-sized VMEM)
        vmem_bytes = 64 << 20
    if vmem_bytes >= (100 << 20):            # v5e / v6e (128 MiB VMEM)
        return 512, 1024, 2048, 100 << 20, False
    return 256, 512, 1024, 44 << 20, True    # v7x (64 MiB VMEM, 2 TCs)


def _weight_block_spec(block_shape, index_map, buffers):
    """Weight BlockSpec, with deeper multi-buffering when requested."""
    if buffers > 2:
        try:
            return pl.BlockSpec(block_shape, index_map,
                                pipeline_mode=pl.Buffered(buffers))
        except (TypeError, AttributeError):
            pass  # older Pallas: fall back to default double buffering
    return pl.BlockSpec(block_shape, index_map)


# -----------------------------------------------------------------------------
# Kernel
# -----------------------------------------------------------------------------
def _linear_kernel(x_ref, w_ref, b_ref, o_ref, acc_ref, *, apply_relu):
    """One (bm, bn) output tile; accumulates over the K grid axis.

    x_ref:   (bm, bk)  input tile                (compute dtype)
    w_ref:   (bk, bn)  weight tile, ALREADY in (K, N) layout -> plain MXU
                       contraction, no per-tile transpose.
    b_ref:   (1,  bn)  bias tile (f32)
    o_ref:   (bm, bn)  output tile (out dtype)
    acc_ref: (bm, bn)  f32 VMEM accumulator (scratch, persists across k)

    Correctness relies on K being the innermost "arbitrary" grid axis and the
    output index_map being k-independent -- do not reorder the grid.
    """
    k = pl.program_id(2)

    @pl.when(k == 0)
    def _():
        # Initialize the accumulator with the broadcast bias -> no epilogue add.
        acc_ref[...] = jnp.broadcast_to(b_ref[...], acc_ref.shape)

    acc_ref[...] += jnp.dot(x_ref[...], w_ref[...],
                            preferred_element_type=jnp.float32)

    @pl.when(k == pl.num_programs(2) - 1)
    def _():
        y = acc_ref[...]
        if apply_relu:
            y = jnp.maximum(y, 0.0)
        o_ref[...] = y.astype(o_ref.dtype)


def _linear_pallas(xp, wtp, bp, *, bm, bn, bk, apply_relu, out_dtype, vmem_cap):
    Mp, Kp = xp.shape
    _, Np = wtp.shape
    grid = (Mp // bm, Np // bn, Kp // bk)

    csz = jnp.dtype(xp.dtype).itemsize
    osz = jnp.dtype(out_dtype).itemsize

    # Small-M / weight-streaming regime: the binding resource is the (bk, bn)
    # weight DMA; deepen its buffering to hide DMA latency.
    w_buffers = 3 if (grid[0] == 1 and grid[2] >= 2) else 2

    # Honest VMEM budget (each buffer counted once; no double-counting).
    footprint = (2 * bm * bk * csz              # x, double-buffered
                 + w_buffers * bk * bn * csz    # weight buffers
                 + 2 * bn * 4                   # bias, double-buffered
                 + 2 * bm * bn * osz            # output, double-buffered
                 + bm * bn * 4)                 # f32 accumulator scratch
    vmem_limit = int(min(max(footprint + (4 << 20), 16 << 20), vmem_cap))

    cost = pl.CostEstimate(
        flops=2 * Mp * Np * Kp,
        transcendentals=0,
        bytes_accessed=Mp * Kp * csz + Kp * Np * csz + Np * 4 + Mp * Np * osz,
    )

    return pl.pallas_call(
        functools.partial(_linear_kernel, apply_relu=apply_relu),
        out_shape=jax.ShapeDtypeStruct((Mp, Np), out_dtype),
        grid_spec=pltpu.PrefetchScalarGridSpec(
            num_scalar_prefetch=0,
            grid=grid,
            in_specs=[
                pl.BlockSpec((bm, bk), lambda i, j, k: (i, k)),            # x
                _weight_block_spec((bk, bn), lambda i, j, k: (k, j),       # W^T
                                   w_buffers),
                pl.BlockSpec((1, bn), lambda i, j, k: (0, j)),             # bias
            ],
            out_specs=pl.BlockSpec((bm, bn), lambda i, j, k: (i, j)),
            scratch_shapes=[pltpu.VMEM((bm, bn), jnp.float32)],
        ),
        compiler_params=pltpu.CompilerParams(
            dimension_semantics=("parallel", "parallel", "arbitrary"),
            vmem_limit_bytes=vmem_limit,
        ),
        cost_estimate=cost,
    )(xp, wtp, bp)


# -----------------------------------------------------------------------------
# Module-level wrapper with cached (pre-transposed / padded / cast) parameters.
# -----------------------------------------------------------------------------
class PallasLinear:
    """Pallas equivalent of the PyTorch `Linear` module forward.

    Parameters are prepared ONCE: weight transposed to (K, N), padded to tile
    multiples and cast to the compute dtype; bias padded to (1, Np) f32.
    Per-call parameter work (and its HBM traffic) is therefore zero.
    """

    def __init__(self, weight, bias, *, apply_relu=True, compute_dtype=None,
                 out_dtype=jnp.float32, bm=None, bn=None, bk=None):
        N, K = weight.shape
        assert bias.shape == (N,), "bias must be (out_features,)"
        self.N, self.K = N, K
        self.apply_relu = bool(apply_relu)
        self.out_dtype = jnp.dtype(out_dtype)
        # Default keeps the parameter dtype (f32 -> exact PyTorch numerics).
        # Pass compute_dtype=jnp.bfloat16 for ~2x MXU throughput / HBM bytes
        # (f32 accumulation kept either way).
        self.compute_dtype = jnp.dtype(weight.dtype if compute_dtype is None
                                       else compute_dtype)
        csz = self.compute_dtype.itemsize
        # Sublane packing: 8 rows/vreg for 4-byte, 16 for bf16, 32 for 8-bit.
        self._sub = max(8, 32 // csz)

        cap_bm, cap_bn, cap_bk, self._vmem_cap, self._small_vmem = _generation_caps()
        self._cap_bm = cap_bm
        self._user_bm = bm
        self.bn = min(cap_bn, _round_up(N, 128)) if bn is None else int(bn)
        self.bk = min(cap_bk, _round_up(K, 128)) if bk is None else int(bk)
        if self.bn % 128 or self.bk % 128:
            raise ValueError("bn and bk must be multiples of 128")
        if bm is not None and bm % self._sub:
            raise ValueError(
                f"bm must be a multiple of {self._sub} for {self.compute_dtype}")

        self.Np = _round_up(N, self.bn)
        self.Kp = _round_up(K, self.bk)
        # One-time parameter prep (zero K-padding contributes 0 to the dot).
        wt = weight.astype(self.compute_dtype).T                     # (K, N)
        self.wt = jnp.pad(wt, ((0, self.Kp - K), (0, self.Np - N)))  # (Kp, Np)
        self.b = jnp.pad(bias.astype(jnp.float32).reshape(1, N),
                         ((0, 0), (0, self.Np - N)))                 # (1, Np)

    def __call__(self, x):
        lead = x.shape[:-1]
        assert x.shape[-1] == self.K, "in_features mismatch"
        x2 = x.reshape(-1, self.K)
        M = x2.shape[0]

        bm = (self._user_bm if self._user_bm is not None
              else min(self._cap_bm, _round_up(M, self._sub)))
        Mp = _round_up(M, bm)

        if x2.dtype != self.compute_dtype:
            x2 = x2.astype(self.compute_dtype)
        if (Mp, self.Kp) != (M, self.K):
            x2 = jnp.pad(x2, ((0, Mp - M), (0, self.Kp - self.K)))

        # v7x has 2 TensorCores: make sure a "parallel" grid axis has extent
        # >= 2 when possible so both cores get work (bn/2 still divides Np).
        bn = self.bn
        if (self._small_vmem and Mp // bm == 1 and self.Np // bn == 1
                and bn % 256 == 0):
            bn //= 2

        y = _linear_pallas(x2, self.wt, self.b, bm=bm, bn=bn, bk=self.bk,
                           apply_relu=self.apply_relu,
                           out_dtype=self.out_dtype, vmem_cap=self._vmem_cap)
        if (Mp, self.Np) != (M, self.N):
            y = y[:M, :self.N]
        return y.reshape(*lead, self.N)


def linear_relu(x, weight, bias, *, apply_relu=True, compute_dtype=None,
                out_dtype=jnp.float32, bm=None, bn=None, bk=None):
    """One-shot y = [relu](x @ weight.T + bias), matching nn.Linear [+ ReLU].

    For repeated calls with the same parameters, build `PallasLinear` once so
    the padded/transposed weight is cached instead of re-streamed every call.
    """
    return PallasLinear(weight, bias, apply_relu=apply_relu,
                        compute_dtype=compute_dtype, out_dtype=out_dtype,
                        bm=bm, bn=bn, bk=bk)(x)


if __name__ == "__main__":
    # Module config: Linear(size1=32, size2=64, recompute=False, R=True)
    # `recompute` (torch checkpoint) only changes backward memory; the forward
    # math implemented here is identical.
    size1, size2, batch = 32, 64, 8

    key = jax.random.PRNGKey(0)
    kx, kw, kx2, kw2 = jax.random.split(key, 4)

    x = jax.random.normal(kx, (batch, size1), dtype=jnp.float32)
    # _initialize_weights: Linear -> weight ~ Normal(0, 0.01), bias = 0
    weight = 0.01 * jax.random.normal(kw, (size2, size1), dtype=jnp.float32)
    bias = jnp.zeros((size2,), dtype=jnp.float32)

    y_ref = jnp.maximum(x @ weight.T + bias, 0.0)

    # 1) Cached-parameter module, f32 compute: exact PyTorch-equivalent math.
    lin = PallasLinear(weight, bias, apply_relu=True)
    y = jax.block_until_ready(lin(x))
    assert y.shape == (batch, size2) and y.dtype == jnp.float32
    assert jnp.allclose(y, y_ref, atol=1e-5, rtol=1e-5)

    # 2) bf16 compute (f32 accumulation) -- the fast MXU / low-HBM-bytes path.
    lin_bf16 = PallasLinear(weight, bias, apply_relu=True,
                            compute_dtype=jnp.bfloat16)
    y_bf16 = jax.block_until_ready(lin_bf16(x))
    assert jnp.allclose(y_bf16, y_ref, atol=5e-3, rtol=5e-2)

    # 3) R=False variant (no ReLU), via the one-shot functional wrapper.
    y_nr = jax.block_until_ready(linear_relu(x, weight, bias, apply_relu=False))
    assert jnp.allclose(y_nr, x @ weight.T + bias, atol=1e-5, rtol=1e-5)

    # 4) Ragged multi-tile case: K-axis accumulation across grid steps, M/K/N
    #    zero-padding, and the deeper weight buffering (small-M regime).
    M2, K2, N2 = 8, 300, 200
    x2 = jax.random.normal(kx2, (M2, K2), dtype=jnp.float32)
    w2 = 0.01 * jax.random.normal(kw2, (N2, K2), dtype=jnp.float32)
    b2 = jnp.zeros((N2,), dtype=jnp.float32)
    y2 = jax.block_until_ready(
        PallasLinear(w2, b2, apply_relu=True, bn=128, bk=128)(x2))
    y2_ref = jnp.maximum(x2 @ w2.T + b2, 0.0)
    assert y2.shape == (M2, N2)
    assert jnp.allclose(y2, y2_ref, atol=1e-5, rtol=1e-4)

    print("KERNEL_OK")
</pallas_src>

<mosaic_0001>
module attributes {stable_mosaic.version = 11 : i64} {
  func.func @_linear_kernel(%arg0: i32, %arg1: i32, %arg2: i32, %arg3: memref<8x128xf32, #tpu.memory_space<vmem>>, %arg4: memref<128x128xf32, #tpu.memory_space<vmem>>, %arg5: memref<1x128xf32, #tpu.memory_space<vmem>>, %arg6: memref<8x128xf32, #tpu.memory_space<vmem>>, %arg7: memref<8x128xf32, #tpu.memory_space<vmem>>) attributes {dimension_semantics = [#tpu.dimension_semantics<parallel>, #tpu.dimension_semantics<parallel>, #tpu.dimension_semantics<arbitrary>], iteration_bounds = array<i64: 1, 1, 1>, scalar_prefetch = 0 : i64, scratch_operands = 1 : i64, tpu.core_type = #tpu.core_type<tc>, window_params = [{transform_indices = @transform_0, window_bounds = array<i64: 8, 128>}, {transform_indices = @transform_1, window_bounds = array<i64: 128, 128>}, {transform_indices = @transform_2, window_bounds = array<i64: 1, 128>}, {transform_indices = @transform_3, window_bounds = array<i64: 8, 128>}]} {
    %c0_i32 = arith.constant 0 : i32
    %0 = arith.cmpi eq, %arg2, %c0_i32 : i32
    %1 = arith.extui %0 : i1 to i32
    %c0_i32_0 = arith.constant 0 : i32
    %2 = arith.cmpi ne, %1, %c0_i32_0 : i32
    scf.if %2 {
      %c0_10 = arith.constant 0 : index
      %c0_11 = arith.constant 0 : index
      %12 = vector.load %arg5[%c0_10, %c0_11] : memref<1x128xf32, #tpu.memory_space<vmem>>, vector<1x128xf32>
      %13 = vector.shape_cast %12 : vector<1x128xf32> to vector<1x128xf32>
      %14 = vector.broadcast %13 : vector<1x128xf32> to vector<8x128xf32>
      %c0_12 = arith.constant 0 : index
      %c0_13 = arith.constant 0 : index
      %15 = vector.load %arg7[%c0_12, %c0_13] : memref<8x128xf32, #tpu.memory_space<vmem>>, vector<8x128xf32>
      tpu.vector_store %arg7[%c0_12, %c0_13], %14 {strides = array<i32>} : memref<8x128xf32, #tpu.memory_space<vmem>>, vector<8x128xf32>,
    } else {
    }
    %c0 = arith.constant 0 : index
    %c0_1 = arith.constant 0 : index
    %3 = vector.load %arg7[%c0, %c0_1] : memref<8x128xf32, #tpu.memory_space<vmem>>, vector<8x128xf32>
    %c0_2 = arith.constant 0 : index
    %c0_3 = arith.constant 0 : index
    %4 = vector.load %arg3[%c0_2, %c0_3] : memref<8x128xf32, #tpu.memory_space<vmem>>, vector<8x128xf32>
    %c0_4 = arith.constant 0 : index
    %c0_5 = arith.constant 0 : index
    %5 = vector.load %arg4[%c0_4, %c0_5] : memref<128x128xf32, #tpu.memory_space<vmem>>, vector<128x128xf32>
    %cst = arith.constant dense<0.000000e+00> : vector<8x128xf32>
    %6 = tpu.matmul %4, %5, %cst {dimension_numbers = #tpu.dot_dimension_numbers<[1], [0], [0], [1], [0, 0, 1, 1], [], []>} : vector<8x128xf32>, vector<128x128xf32>, vector<8x128xf32> -> vector<8x128xf32>
    %7 = arith.addf %3, %6 : vector<8x128xf32>
    %c0_6 = arith.constant 0 : index
    %c0_7 = arith.constant 0 : index
    %8 = vector.load %arg7[%c0_6, %c0_7] : memref<8x128xf32, #tpu.memory_space<vmem>>, vector<8x128xf32>
    tpu.vector_store %arg7[%c0_6, %c0_7], %7 {strides = array<i32>} : memref<8x128xf32, #tpu.memory_space<vmem>>, vector<8x128xf32>,
    %c0_i32_8 = arith.constant 0 : i32
    %9 = arith.cmpi eq, %arg2, %c0_i32_8 : i32
    %10 = arith.extui %9 : i1 to i32
    %c0_i32_9 = arith.constant 0 : i32
    %11 = arith.cmpi ne, %10, %c0_i32_9 : i32
    scf.if %11 {
      %c0_10 = arith.constant 0 : index
      %c0_11 = arith.constant 0 : index
      %12 = vector.load %arg7[%c0_10, %c0_11] : memref<8x128xf32, #tpu.memory_space<vmem>>, vector<8x128xf32>
      %cst_12 = arith.constant 0.000000e+00 : f32
      %13 = vector.broadcast %cst_12 : f32 to vector<8x128xf32>
      %14 = arith.maximumf %12, %13 : vector<8x128xf32>
      %c0_13 = arith.constant 0 : index
      %c0_14 = arith.constant 0 : index
      %15 = vector.load %arg6[%c0_13, %c0_14] : memref<8x128xf32, #tpu.memory_space<vmem>>, vector<8x128xf32>
      tpu.vector_store %arg6[%c0_13, %c0_14], %14 {strides = array<i32>} : memref<8x128xf32, #tpu.memory_space<vmem>>, vector<8x128xf32>,
    } else {
    }
    return
  }
  func.func @transform_0(%arg0: i32, %arg1: i32, %arg2: i32) -> (i32, i32) {
    %c0_i32 = arith.constant 0 : i32
    return %arg0, %arg2 : i32, i32
  }
  func.func @transform_1(%arg0: i32, %arg1: i32, %arg2: i32) -> (i32, i32) {
    %c0_i32 = arith.constant 0 : i32
    return %arg2, %arg1 : i32, i32
  }
  func.func @transform_2(%arg0: i32, %arg1: i32, %arg2: i32) -> (i32, i32) {
    %c0_i32 = arith.constant 0 : i32
    %c0_i32_0 = arith.constant 0 : i32
    return %c0_i32, %arg1 : i32, i32
  }
  func.func @transform_3(%arg0: i32, %arg1: i32, %arg2: i32) -> (i32, i32) {
    %c0_i32 = arith.constant 0 : i32
    return %arg0, %arg1 : i32, i32
  }
}

</mosaic_0001>

<llo_original>
// kernel: tpu_custom_call.1
$region0: #{tpu_custom_call.1}
  #allocation0 [shape = 'u32[]', space=smem, size = 0x4, offset = 0x4, fixed_abs, tag = 'smem constant byte address 0x4 - core index']
  #allocation1 [shape = 'u32[144,128]{1,0:T(1,128)}', space=vmem, size = 0x12000, scoped, tag = 'internal scratch']
  #allocation2 [shape = 'f32[8,128]{1,0:T(8,128)}', space=vmem, size = 0x1000, scoped, tag = 'scratch operand']
  %s0 = inlined_call_operand.hbm [shape: f32[8,128], index: 0, kind: input, shape index: {}]
  %s1 = inlined_call_operand.hbm [shape: f32[128,128], index: 1, kind: input, shape index: {}]
  %s2 = inlined_call_operand.vmem [shape: f32[1,128], index: 2, kind: input, shape index: {}]
  %s3 = inlined_call_operand.hbm [shape: f32[8,128], index: 3, kind: output, shape index: {}]
  %s4 = sld [smem:[#allocation0]]
  $region38: #{tpu_custom_call.1} parent=0
    _
  %s6 = ssub.s32 1, %s4
  %s7 = scalar_select 0, %s6, %s4
  $region1: #{tpu_custom_call.1} parent=0
    #allocation3 [shape = 'u8[4096]{0}', space=vmem, size = 0x1000, scoped, tag = 'input window, operand 0, single buffered']
    #allocation4 [shape = 's32[1]{0}', space=sflag, size = 0x4, scoped, tag = 'scoped memory for tpu_custom_call.1']
    #allocation5 [shape = 's32[1]{0}', space=sflag, size = 0x4, scoped, tag = 'scoped memory for tpu_custom_call.1']
    #allocation6 [shape = 'u8[65536]{0}', space=vmem, size = 0x10000, scoped, tag = 'input window, operand 1, single buffered']
    #allocation7 [shape = 's32[1]{0}', space=sflag, size = 0x4, scoped, tag = 'scoped memory for tpu_custom_call.1']
    #allocation8 [shape = 'u8[4096]{0}', space=vmem, size = 0x1000, scoped, tag = 'output window, operand 0, single buffered']
    %8 = vsyncpa [#allocation4], 0
    %9 = vsyncpa [#allocation7], 0
    %10 = vsyncpa [#allocation5], 0
    // Predicated region
    $region2: #{tpu_custom_call.1} parent=1 // pred_check
      _
    $region3: #{tpu_custom_call.1} parent=1 // pred_check_branch
      %12 = sbr.rel (0) target = $region5
    $region4: #{tpu_custom_call.1} parent=1 // pred_region
      %s14 = ssub.s32 128, 128
      %15 = vsyncadd [#allocation4], %s14
      %s17 = sshll.u32 [#allocation3], 4
      %s18 = int_to_ptr.vmem [resolvable:$true] %s17
      %20 = dma.hbm_to_vmem [thread:$0]  %s0, 128, %s18, [#allocation4]
    $region5: #{tpu_custom_call.1} parent=1 // pred_fallthru
      _
    // Predicated region
    $region6: #{tpu_custom_call.1} parent=1 // pred_check
      _
    $region7: #{tpu_custom_call.1} parent=1 // pred_check_branch
      %22 = sbr.rel (0) target = $region9
    $region8: #{tpu_custom_call.1} parent=1 // pred_region
      %s24 = ssub.s32 2048, 2048
      %25 = vsyncadd [#allocation7], %s24
      %s26 = sshll.u32 [#allocation6], 4
      %s27 = int_to_ptr.vmem [resolvable:$true] %s26
      %32 = dma.hbm_to_vmem [thread:$0]  %s1, 2048, %s27, [#allocation7], 128, 128, 8
    $region9: #{tpu_custom_call.1} parent=1 // pred_fallthru
      _
    // Predicated region
    $region10: #{tpu_custom_call.1} parent=1 // pred_check
      _
    $region11: #{tpu_custom_call.1} parent=1 // pred_check_branch
      %34 = sbr.rel (0) target = $region13
    $region12: #{tpu_custom_call.1} parent=1 // pred_region
      _
    $region13: #{tpu_custom_call.1} parent=1 // pred_fallthru
      _
    // Predicated region
    $region14: #{tpu_custom_call.1} parent=1 // pred_check
      _
    $region15: #{tpu_custom_call.1} parent=1 // pred_check_branch
      %36 = sbr.rel (0) target = $region17
    $region16: #{tpu_custom_call.1} parent=1 // pred_region
      %37 = dma.done [#allocation4], 128
    $region17: #{tpu_custom_call.1} parent=1 // pred_fallthru
      _
    // Predicated region
    $region18: #{tpu_custom_call.1} parent=1 // pred_check
      _
    $region19: #{tpu_custom_call.1} parent=1 // pred_check_branch
      %39 = sbr.rel (0) target = $region21
    $region20: #{tpu_custom_call.1} parent=1 // pred_region
      %40 = dma.done [#allocation7], 2048
    $region21: #{tpu_custom_call.1} parent=1 // pred_fallthru
      _
    %p41 = scmp.eq.s32.totalorder 0, 0
    // Predicated region
    $region22: #{tpu_custom_call.1} parent=1 // pred_check
      %p42 = pneg %p41
    $region23: #{tpu_custom_call.1} parent=1 // pred_check_branch
      %44 = sbr.rel (%p42) target = $region25
    $region24: #{tpu_custom_call.1} parent=1 // pred_region
      %v45 = vld [vmem:[%s2] sm:$0x1]
      %v47 = vlaneseq
      %v48 = vshrl.u32 %v47, 7
      %v49 = vsub.s32 0, %v48
      %v50 = vrot.slane %v45, %v49
      %52 = vst [vmem:[#allocation2] sm:$0xff] %v50
    $region25: #{tpu_custom_call.1} parent=1 // pred_fallthru
      _
    %v53 = vld [vmem:[#allocation2] sm:$0xff]
    %v54 = vld [vmem:[#allocation3] sm:$0xff]
    %v55 = vld [vmem:[#allocation6] sm:$0xff]
    %v56 = vld [vmem:[#allocation6 + $0x8] sm:$0xff]
    %v57 = vld [vmem:[#allocation6 + $0x10] sm:$0xff]
    %v58 = vld [vmem:[#allocation6 + $0x18] sm:$0xff]
    %v59 = vld [vmem:[#allocation6 + $0x20] sm:$0xff]
    %v60 = vld [vmem:[#allocation6 + $0x28] sm:$0xff]
    %v61 = vld [vmem:[#allocation6 + $0x30] sm:$0xff]
    %v62 = vld [vmem:[#allocation6 + $0x38] sm:$0xff]
    %v63 = vld [vmem:[#allocation6 + $0x40] sm:$0xff]
    %v64 = vld [vmem:[#allocation6 + $0x48] sm:$0xff]
    %v65 = vld [vmem:[#allocation6 + $0x50] sm:$0xff]
    %v66 = vld [vmem:[#allocation6 + $0x58] sm:$0xff]
    %v67 = vld [vmem:[#allocation6 + $0x60] sm:$0xff]
    %v68 = vld [vmem:[#allocation6 + $0x68] sm:$0xff]
    %v69 = vld [vmem:[#allocation6 + $0x70] sm:$0xff]
    %v70 = vld [vmem:[#allocation6 + $0x78] sm:$0xff]
    %71 = vmatprep.subr.mxu0 0.0
    %72 = vmatpush1.msra.mxu0 %v70
    %73 = vmatprep.subr.mxu0 0.0
    %74 = vmatpush1.msra.mxu0 %v69
    %75 = vmatprep.subr.mxu0 0.0
    %76 = vmatpush1.msra.mxu0 %v68
    %77 = vmatprep.subr.mxu0 0.0
    %78 = vmatpush1.msra.mxu0 %v67
    %79 = vmatprep.subr.mxu0 0.0
    %80 = vmatpush1.msra.mxu0 %v66
    %81 = vmatprep.subr.mxu0 0.0
    %82 = vmatpush1.msra.mxu0 %v65
    %83 = vmatprep.subr.mxu0 0.0
    %84 = vmatpush1.msra.mxu0 %v64
    %85 = vmatprep.subr.mxu0 0.0
    %86 = vmatpush1.msra.mxu0 %v63
    %87 = vmatprep.subr.mxu0 0.0
    %88 = vmatpush1.msra.mxu0 %v62
    %89 = vmatprep.subr.mxu0 0.0
    %90 = vmatpush1.msra.mxu0 %v61
    %91 = vmatprep.subr.mxu0 0.0
    %92 = vmatpush1.msra.mxu0 %v60
    %93 = vmatprep.subr.mxu0 0.0
    %94 = vmatpush1.msra.mxu0 %v59
    %95 = vmatprep.subr.mxu0 0.0
    %96 = vmatpush1.msra.mxu0 %v58
    %97 = vmatprep.subr.mxu0 0.0
    %98 = vmatpush1.msra.mxu0 %v57
    %99 = vmatprep.subr.mxu0 0.0
    %100 = vmatpush1.msra.mxu0 %v56
    %101 = vmatprep.subr.mxu0 0.0
    %102 = vmatpush1.msra.mxu0 %v55
    %103 = vmatprep.subr.mxu0 0.0
    %104 = vmatpush2.msra.mxu0 0.0
    %105 = vmatprep.subr.mxu0 0.0
    %106 = vmatpush2.msra.mxu0 0.0
    %107 = vmatprep.subr.mxu0 0.0
    %108 = vmatpush2.msra.mxu0 0.0
    %109 = vmatprep.subr.mxu0 0.0
    %110 = vmatpush2.msra.mxu0 0.0
    %111 = vmatprep.subr.mxu0 0.0
    %112 = vmatpush2.msra.mxu0 0.0
    %113 = vmatprep.subr.mxu0 0.0
    %114 = vmatpush2.msra.mxu0 0.0
    %115 = vmatprep.subr.mxu0 0.0
    %116 = vmatpush2.msra.mxu0 0.0
    %117 = vmatprep.subr.mxu0 0.0
    %118 = vmatpush2.msra.mxu0 0.0
    %119 = vmatprep.subr.mxu0 0.0
    %120 = vmatpush2.msra.mxu0 0.0
    %121 = vmatprep.subr.mxu0 0.0
    %122 = vmatpush2.msra.mxu0 0.0
    %123 = vmatprep.subr.mxu0 0.0
    %124 = vmatpush2.msra.mxu0 0.0
    %125 = vmatprep.subr.mxu0 0.0
    %126 = vmatpush2.msra.mxu0 0.0
    %127 = vmatprep.subr.mxu0 0.0
    %128 = vmatpush2.msra.mxu0 0.0
    %129 = vmatprep.subr.mxu0 0.0
    %130 = vmatpush2.msra.mxu0 0.0
    %131 = vmatprep.subr.mxu0 0.0
    %132 = vmatpush2.msra.mxu0 0.0
    %133 = vmatprep.subr.mxu0 0.0
    %134 = vmatpush2.msra.mxu0 0.0
    %135 = vmatprep.mubr.f32.mxu0 0.0
    %136 = vmatmul.mubr.f32.gmra.mxu0 %v54
    %v137 = vpop.f32.mrf.mxu0
    %v138 = vadd.f32 0.0, %v137
    %v139 = vpop.f32.mrf.mxu0
    %140 = vdwg.mxu0
    %v141 = vadd.f32 %v53, %v138
    %142 = vst [vmem:[#allocation2] sm:$0xff] %v141
    // Predicated region
    $region26: #{tpu_custom_call.1} parent=1 // pred_check
      %p143 = pneg %p41
    $region27: #{tpu_custom_call.1} parent=1 // pred_check_branch
      %145 = sbr.rel (%p143) target = $region29
    $region28: #{tpu_custom_call.1} parent=1 // pred_region
      %v146 = vld [vmem:[#allocation2] sm:$0xff]
      %v147 = vmax.f32 %v146, 0.0
      %148 = vst [vmem:[#allocation8] sm:$0xff] %v147
    $region29: #{tpu_custom_call.1} parent=1 // pred_fallthru
      _
    // Predicated region
    $region30: #{tpu_custom_call.1} parent=1 // pred_check
      _
    $region31: #{tpu_custom_call.1} parent=1 // pred_check_branch
      %150 = sbr.rel (0) target = $region33
    $region32: #{tpu_custom_call.1} parent=1 // pred_region
      %s152 = ssub.s32 128, 128
      %153 = vsyncadd [#allocation5], %s152
      %s155 = sshll.u32 [#allocation8], 4
      %s156 = int_to_ptr.vmem [resolvable:$true] %s155
      %158 = dma.vmem_to_hbm [thread:$0]  %s156, 128, %s3, [#allocation5]
    $region33: #{tpu_custom_call.1} parent=1 // pred_fallthru
      _
    // Predicated region
    $region34: #{tpu_custom_call.1} parent=1 // pred_check
      _
    $region35: #{tpu_custom_call.1} parent=1 // pred_check_branch
      %160 = sbr.rel (0) target = $region37
    $region36: #{tpu_custom_call.1} parent=1 // pred_region
      %161 = dma.done [#allocation5], 128
    $region37: #{tpu_custom_call.1} parent=1 // pred_fallthru
      _
    %162 = vsyncpa [#allocation4], 1
    %163 = vsyncpa [#allocation7], 1
    %164 = vsyncpa [#allocation5], 1

</llo_original>
